<compile_context>
chip_gen: v5e
topology: v5e:2x2
jax: 0.10.0
libtpu: 0.0.40
codegen_flags: <defaults>
</compile_context>

<pallas_src>
import jax
import jax.numpy as jnp
from jax.experimental import pallas as pl
from jax.experimental.pallas import tpu as pltpu


def _round_up(x, m):
    return ((x + m - 1) // m) * m


def _cdiv(a, b):
    return (a + b - 1) // b


def _choose_tiling(batch, tile_b_max=1024):
    """Balanced, 16-row-aligned batch tiles; >=2 grid steps when B is large."""
    tile_b_max = max(16, _round_up(tile_b_max, 16))
    num_tiles = _cdiv(batch, tile_b_max)
    # v7x has 2 TensorCores: make sure the "parallel" batch axis has at least
    # two grid steps whenever each step still gets a decent (>=128-row) tile.
    if batch >= 256:
        num_tiles = max(num_tiles, 2)
    tile_b = _round_up(_cdiv(batch, num_tiles), 16)
    grid = _cdiv(batch, tile_b)
    return tile_b, grid, tile_b * grid


def actor_kernel(x_ref, w1_ref, b1_ref, w2_ref, b2_ref, w3_ref, b3_ref, mean_ref):
    # state arrives unpadded in f32; cast to bf16 for the MXU.  All matmuls
    # accumulate in f32; bias/ReLU/tanh stay in f32.
    x = x_ref[...].astype(jnp.bfloat16)
    h1 = jnp.dot(x, w1_ref[...], preferred_element_type=jnp.float32) + b1_ref[...]
    h1 = jnp.maximum(h1, 0.0)                                   # ReLU
    h2 = jnp.dot(h1.astype(jnp.bfloat16), w2_ref[...],
                 preferred_element_type=jnp.float32) + b2_ref[...]
    h2 = jnp.maximum(h2, 0.0)                                   # ReLU
    out = jnp.dot(h2.astype(jnp.bfloat16), w3_ref[...],
                  preferred_element_type=jnp.float32) + b3_ref[...]
    mean_ref[...] = jnp.tanh(out).astype(mean_ref.dtype)        # Tanh -> bf16


def actor_forward(state, params, tile_b_max=1024):
    """Actor forward pass. Returns (mean[B, A] f32, std[A] f32)."""
    w1, b1, w2, b2, w3, b3, log_std = params
    B, obs = state.shape
    H1, H2, A = w1.shape[1], w2.shape[1], w3.shape[1]

    # Hidden/action dims padded to the 128-lane width; obs stays unpadded.
    H1p, H2p, Ap = (_round_up(d, 128) for d in (H1, H2, A))
    tile_b, grid, Bp = _choose_tiling(B, tile_b_max)

    state = state.astype(jnp.float32)
    if Bp != B:
        # Only pay the pad copy when B is not already tile-aligned.
        xp = jnp.zeros((Bp, obs), jnp.float32).at[:B].set(state)
    else:
        xp = state

    def pad2(a, rows, cols, dtype):
        if a.shape == (rows, cols) and a.dtype == dtype:
            return a
        out = jnp.zeros((rows, cols), dtype)
        return out.at[: a.shape[0], : a.shape[1]].set(a.astype(dtype))

    w1p = pad2(w1, obs, H1p, jnp.bfloat16)            # (obs, H1p)  bf16
    w2p = pad2(w2, H1p, H2p, jnp.bfloat16)            # (H1p, H2p)  bf16
    w3p = pad2(w3, H2p, Ap, jnp.bfloat16)             # (H2p, Ap)   bf16
    b1p = pad2(b1.reshape(1, -1), 1, H1p, jnp.float32)
    b2p = pad2(b2.reshape(1, -1), 1, H2p, jnp.float32)
    b3p = pad2(b3.reshape(1, -1), 1, Ap, jnp.float32)

    # VMEM budget: double-buffered resident weights/biases + double-buffered
    # batch-tile I/O + f32/bf16 intermediates + slack.  Hard-capped at 48 MiB
    # so the request is always valid on v7x (64 MiB physical VMEM/TC).
    weight_bytes = (2 * (obs * H1p + H1p * H2p + H2p * Ap)      # bf16 weights
                    + 4 * (H1p + H2p + Ap))                     # f32 biases
    io_bytes = 2 * tile_b * (obs * 4 + Ap * 2)                  # 2-deep in/out tiles
    act_bytes = tile_b * ((H1p + H2p) * 6 + Ap * 4 + obs * 2)   # f32 acts + bf16 casts
    vmem_limit = int(min(2 * weight_bytes + io_bytes + act_bytes + (8 << 20),
                         48 << 20))

    cost = pl.CostEstimate(
        flops=2 * Bp * (obs * H1p + H1p * H2p + H2p * Ap),
        transcendentals=Bp * Ap,
        bytes_accessed=Bp * obs * 4 + Bp * Ap * 2 + weight_bytes,
    )

    const = lambda i: (0, 0)
    mean_padded = pl.pallas_call(
        actor_kernel,
        out_shape=jax.ShapeDtypeStruct((Bp, Ap), jnp.bfloat16),
        grid=(grid,),
        in_specs=[
            pl.BlockSpec((tile_b, obs), lambda i: (i, 0)),   # batch-tiled state
            pl.BlockSpec((obs, H1p), const),                 # resident weights
            pl.BlockSpec((1, H1p), const),
            pl.BlockSpec((H1p, H2p), const),
            pl.BlockSpec((1, H2p), const),
            pl.BlockSpec((H2p, Ap), const),
            pl.BlockSpec((1, Ap), const),
        ],
        out_specs=pl.BlockSpec((tile_b, Ap), lambda i: (i, 0)),
        compiler_params=pltpu.CompilerParams(
            dimension_semantics=("parallel",),
            vmem_limit_bytes=vmem_limit,
        ),
        cost_estimate=cost,
    )(xp, w1p, b1p, w2p, b2p, w3p, b3p)

    mean = mean_padded[:B, :A].astype(jnp.float32)
    # std is batch-independent -> plain JAX (matches torch.exp(self.log_std)).
    std = jnp.exp(log_std)
    return mean, std


def init_actor_params(key, observation_size, num_actions, hidden_size=None):
    """Synthetic init matching nn.Linear default U(-1/sqrt(fan_in), +)."""
    if hidden_size is None:
        hidden_size = [256, 256]
    dims = [observation_size, hidden_size[0], hidden_size[1], num_actions]
    keys = jax.random.split(key, 6)
    params = []
    for i in range(3):
        fan_in, fan_out = dims[i], dims[i + 1]
        bound = 1.0 / jnp.sqrt(fan_in)
        w = jax.random.uniform(keys[2 * i], (fan_in, fan_out),
                               minval=-bound, maxval=bound, dtype=jnp.float32)
        b = jax.random.uniform(keys[2 * i + 1], (fan_out,),
                               minval=-bound, maxval=bound, dtype=jnp.float32)
        params.extend([w, b])
    log_std = jnp.zeros((num_actions,), dtype=jnp.float32)  # nn.Parameter(zeros(A))
    params.append(log_std)
    return tuple(params)


def reference_forward(state, params):
    w1, b1, w2, b2, w3, b3, log_std = params
    h = jnp.maximum(state @ w1 + b1, 0.0)
    h = jnp.maximum(h @ w2 + b2, 0.0)
    mean = jnp.tanh(h @ w3 + b3)
    std = jnp.exp(log_std)
    return mean, std


if __name__ == "__main__":
    observation_size = 16
    num_actions = 8
    hidden_size = [32, 32]
    batch = 4

    key = jax.random.PRNGKey(0)
    k_param, k_state = jax.random.split(key)
    params = init_actor_params(k_param, observation_size, num_actions, hidden_size)
    state = jax.random.normal(k_state, (batch, observation_size), dtype=jnp.float32)

    mean, std = actor_forward(state, params)
    mean = jax.block_until_ready(mean)
    std = jax.block_until_ready(std)

    ref_mean, ref_std = reference_forward(state, params)
    assert mean.shape == (batch, num_actions)
    assert std.shape == (num_actions,)
    # bf16 matmul operands / bf16 mean store with f32 accumulation -> loose
    # tolerance vs the pure-f32 reference.
    assert jnp.allclose(mean, ref_mean, atol=3e-2, rtol=3e-2)
    assert jnp.allclose(std, ref_std, atol=1e-6, rtol=1e-6)

    print("KERNEL_OK")
</pallas_src>

<mosaic_0001>
module attributes {stable_mosaic.version = 11 : i64} {
  func.func @actor_kernel(%arg0: i32, %arg1: memref<16x16xf32, #tpu.memory_space<vmem>>, %arg2: memref<16x128xbf16, #tpu.memory_space<vmem>>, %arg3: memref<1x128xf32, #tpu.memory_space<vmem>>, %arg4: memref<128x128xbf16, #tpu.memory_space<vmem>>, %arg5: memref<1x128xf32, #tpu.memory_space<vmem>>, %arg6: memref<128x128xbf16, #tpu.memory_space<vmem>>, %arg7: memref<1x128xf32, #tpu.memory_space<vmem>>, %arg8: memref<16x128xbf16, #tpu.memory_space<vmem>>) attributes {dimension_semantics = [#tpu.dimension_semantics<parallel>], iteration_bounds = array<i64: 1>, scalar_prefetch = 0 : i64, scratch_operands = 0 : i64, tpu.core_type = #tpu.core_type<tc>, window_params = [{transform_indices = @transform_0, window_bounds = array<i64: 16, 16>}, {pipeline_mode = #tpu.pipeline_mode<synchronous>, transform_indices = @transform_1, window_bounds = array<i64: 16, 128>}, {pipeline_mode = #tpu.pipeline_mode<synchronous>, transform_indices = @transform_2, window_bounds = array<i64: 1, 128>}, {pipeline_mode = #tpu.pipeline_mode<synchronous>, transform_indices = @transform_3, window_bounds = array<i64: 128, 128>}, {pipeline_mode = #tpu.pipeline_mode<synchronous>, transform_indices = @transform_4, window_bounds = array<i64: 1, 128>}, {pipeline_mode = #tpu.pipeline_mode<synchronous>, transform_indices = @transform_5, window_bounds = array<i64: 128, 128>}, {pipeline_mode = #tpu.pipeline_mode<synchronous>, transform_indices = @transform_6, window_bounds = array<i64: 1, 128>}, {transform_indices = @transform_7, window_bounds = array<i64: 16, 128>}]} {
    %c0 = arith.constant 0 : index
    %c0_0 = arith.constant 0 : index
    %0 = vector.load %arg1[%c0, %c0_0] : memref<16x16xf32, #tpu.memory_space<vmem>>, vector<16x16xf32>
    %1 = arith.truncf %0 : vector<16x16xf32> to vector<16x16xbf16>
    %c0_1 = arith.constant 0 : index
    %c0_2 = arith.constant 0 : index
    %2 = vector.load %arg2[%c0_1, %c0_2] : memref<16x128xbf16, #tpu.memory_space<vmem>>, vector<16x128xbf16>
    %cst = arith.constant dense<0.000000e+00> : vector<16x128xf32>
    %3 = tpu.matmul %1, %2, %cst {dimension_numbers = #tpu.dot_dimension_numbers<[1], [0], [0], [1], [0, 0, 1, 1], [], []>} : vector<16x16xbf16>, vector<16x128xbf16>, vector<16x128xf32> -> vector<16x128xf32>
    %c0_3 = arith.constant 0 : index
    %c0_4 = arith.constant 0 : index
    %4 = vector.load %arg3[%c0_3, %c0_4] : memref<1x128xf32, #tpu.memory_space<vmem>>, vector<1x128xf32>
    %5 = vector.broadcast %4 : vector<1x128xf32> to vector<16x128xf32>
    %6 = arith.addf %3, %5 : vector<16x128xf32>
    %cst_5 = arith.constant 0.000000e+00 : f32
    %7 = vector.broadcast %cst_5 : f32 to vector<16x128xf32>
    %8 = arith.maximumf %6, %7 : vector<16x128xf32>
    %9 = arith.truncf %8 : vector<16x128xf32> to vector<16x128xbf16>
    %c0_6 = arith.constant 0 : index
    %c0_7 = arith.constant 0 : index
    %10 = vector.load %arg4[%c0_6, %c0_7] : memref<128x128xbf16, #tpu.memory_space<vmem>>, vector<128x128xbf16>
    %cst_8 = arith.constant dense<0.000000e+00> : vector<16x128xf32>
    %11 = tpu.matmul %9, %10, %cst_8 {dimension_numbers = #tpu.dot_dimension_numbers<[1], [0], [0], [1], [0, 0, 1, 1], [], []>} : vector<16x128xbf16>, vector<128x128xbf16>, vector<16x128xf32> -> vector<16x128xf32>
    %c0_9 = arith.constant 0 : index
    %c0_10 = arith.constant 0 : index
    %12 = vector.load %arg5[%c0_9, %c0_10] : memref<1x128xf32, #tpu.memory_space<vmem>>, vector<1x128xf32>
    %13 = vector.broadcast %12 : vector<1x128xf32> to vector<16x128xf32>
    %14 = arith.addf %11, %13 : vector<16x128xf32>
    %cst_11 = arith.constant 0.000000e+00 : f32
    %15 = vector.broadcast %cst_11 : f32 to vector<16x128xf32>
    %16 = arith.maximumf %14, %15 : vector<16x128xf32>
    %17 = arith.truncf %16 : vector<16x128xf32> to vector<16x128xbf16>
    %c0_12 = arith.constant 0 : index
    %c0_13 = arith.constant 0 : index
    %18 = vector.load %arg6[%c0_12, %c0_13] : memref<128x128xbf16, #tpu.memory_space<vmem>>, vector<128x128xbf16>
    %cst_14 = arith.constant dense<0.000000e+00> : vector<16x128xf32>
    %19 = tpu.matmul %17, %18, %cst_14 {dimension_numbers = #tpu.dot_dimension_numbers<[1], [0], [0], [1], [0, 0, 1, 1], [], []>} : vector<16x128xbf16>, vector<128x128xbf16>, vector<16x128xf32> -> vector<16x128xf32>
    %c0_15 = arith.constant 0 : index
    %c0_16 = arith.constant 0 : index
    %20 = vector.load %arg7[%c0_15, %c0_16] : memref<1x128xf32, #tpu.memory_space<vmem>>, vector<1x128xf32>
    %21 = vector.broadcast %20 : vector<1x128xf32> to vector<16x128xf32>
    %22 = arith.addf %19, %21 : vector<16x128xf32>
    %23 = math.tanh %22 : vector<16x128xf32>
    %24 = arith.truncf %23 : vector<16x128xf32> to vector<16x128xbf16>
    %c0_17 = arith.constant 0 : index
    %c0_18 = arith.constant 0 : index
    %25 = vector.load %arg8[%c0_17, %c0_18] : memref<16x128xbf16, #tpu.memory_space<vmem>>, vector<16x128xbf16>
    tpu.vector_store %arg8[%c0_17, %c0_18], %24 {strides = array<i32>} : memref<16x128xbf16, #tpu.memory_space<vmem>>, vector<16x128xbf16>,
    return
  }
  func.func @transform_0(%arg0: i32) -> (i32, i32) {
    %c0_i32 = arith.constant 0 : i32
    %c0_i32_0 = arith.constant 0 : i32
    return %arg0, %c0_i32 : i32, i32
  }
  func.func @transform_1(%arg0: i32) -> (i32, i32) {
    %c0_i32 = arith.constant 0 : i32
    %c0_i32_0 = arith.constant 0 : i32
    %c0_i32_1 = arith.constant 0 : i32
    return %c0_i32, %c0_i32_0 : i32, i32
  }
  func.func @transform_2(%arg0: i32) -> (i32, i32) {
    %c0_i32 = arith.constant 0 : i32
    %c0_i32_0 = arith.constant 0 : i32
    %c0_i32_1 = arith.constant 0 : i32
    return %c0_i32, %c0_i32_0 : i32, i32
  }
  func.func @transform_3(%arg0: i32) -> (i32, i32) {
    %c0_i32 = arith.constant 0 : i32
    %c0_i32_0 = arith.constant 0 : i32
    %c0_i32_1 = arith.constant 0 : i32
    return %c0_i32, %c0_i32_0 : i32, i32
  }
  func.func @transform_4(%arg0: i32) -> (i32, i32) {
    %c0_i32 = arith.constant 0 : i32
    %c0_i32_0 = arith.constant 0 : i32
    %c0_i32_1 = arith.constant 0 : i32
    return %c0_i32, %c0_i32_0 : i32, i32
  }
  func.func @transform_5(%arg0: i32) -> (i32, i32) {
    %c0_i32 = arith.constant 0 : i32
    %c0_i32_0 = arith.constant 0 : i32
    %c0_i32_1 = arith.constant 0 : i32
    return %c0_i32, %c0_i32_0 : i32, i32
  }
  func.func @transform_6(%arg0: i32) -> (i32, i32) {
    %c0_i32 = arith.constant 0 : i32
    %c0_i32_0 = arith.constant 0 : i32
    %c0_i32_1 = arith.constant 0 : i32
    return %c0_i32, %c0_i32_0 : i32, i32
  }
  func.func @transform_7(%arg0: i32) -> (i32, i32) {
    %c0_i32 = arith.constant 0 : i32
    %c0_i32_0 = arith.constant 0 : i32
    return %arg0, %c0_i32 : i32, i32
  }
}

</mosaic_0001>

<llo_original>
// kernel: tpu_custom_call.1
$region0: #{tpu_custom_call.1}
  #allocation0 [shape = 'u32[]', space=smem, size = 0x4, offset = 0x4, fixed_abs, tag = 'smem constant byte address 0x4 - core index']
  #allocation1 [shape = 'u32[72,128]{1,0:T(1,128)}', space=vmem, size = 0x9000, scoped, tag = 'internal scratch']
  %s0 = inlined_call_operand.hbm [shape: f32[16,16], index: 0, kind: input, shape index: {}]
  %s1 = inlined_call_operand.hbm [shape: bf16[16,128], index: 1, kind: input, shape index: {}]
  %s2 = inlined_call_operand.vmem [shape: f32[1,128], index: 2, kind: input, shape index: {}]
  %s3 = inlined_call_operand.hbm [shape: bf16[128,128], index: 3, kind: input, shape index: {}]
  %s4 = inlined_call_operand.vmem [shape: f32[1,128], index: 4, kind: input, shape index: {}]
  %s5 = inlined_call_operand.hbm [shape: bf16[128,128], index: 5, kind: input, shape index: {}]
  %s6 = inlined_call_operand.vmem [shape: f32[1,128], index: 6, kind: input, shape index: {}]
  %s7 = inlined_call_operand.hbm [shape: bf16[16,128], index: 7, kind: output, shape index: {}]
  %s8 = sld [smem:[#allocation0]]
  $region54: #{tpu_custom_call.1} parent=0
    _
  %s10 = ssub.s32 1, %s8
  %s11 = scalar_select 0, %s10, %s8
  $region1: #{tpu_custom_call.1} parent=0
    #allocation2 [shape = 'u8[8192]{0}', space=vmem, size = 0x2000, scoped, tag = 'input window, operand 0, single buffered']
    #allocation3 [shape = 's32[1]{0}', space=sflag, size = 0x4, scoped, tag = 'scoped memory for tpu_custom_call.1']
    #allocation4 [shape = 's32[1]{0}', space=sflag, size = 0x4, scoped, tag = 'scoped memory for tpu_custom_call.1']
    #allocation5 [shape = 'u8[4096]{0}', space=vmem, size = 0x1000, scoped, tag = 'input window, operand 1, single buffered']
    #allocation6 [shape = 's32[1]{0}', space=sflag, size = 0x4, scoped, tag = 'scoped memory for tpu_custom_call.1']
    #allocation7 [shape = 'u8[32768]{0}', space=vmem, size = 0x8000, scoped, tag = 'input window, operand 3, single buffered']
    #allocation8 [shape = 'u8[32768]{0}', space=vmem, size = 0x8000, scoped, tag = 'input window, operand 5, single buffered']
    #allocation9 [shape = 's32[1]{0}', space=sflag, size = 0x4, scoped, tag = 'scoped memory for tpu_custom_call.1']
    #allocation10 [shape = 'u8[4096]{0}', space=vmem, size = 0x1000, scoped, tag = 'output window, operand 0, single buffered']
    %12 = vsyncpa [#allocation3], 0
    %13 = vsyncpa [#allocation6], 0
    %14 = vsyncpa [#allocation9], 0
    %15 = vsyncpa [#allocation4], 0
    // Predicated region
    $region2: #{tpu_custom_call.1} parent=1 // pred_check
      _
    $region3: #{tpu_custom_call.1} parent=1 // pred_check_branch
      %17 = sbr.rel (0) target = $region5
    $region4: #{tpu_custom_call.1} parent=1 // pred_region
      %19 = vsyncadd [#allocation3], 0
      %s20 = sshll.u32 %s0, 4
      %s21 = int_to_ptr.hbm [resolvable:$true] %s20
      %s22 = sshll.u32 [#allocation2], 4
      %s23 = int_to_ptr.vmem [resolvable:$true] %s22
      %28 = dma.hbm_to_vmem [thread:$0]  %s21, 256, %s23, [#allocation3], 128, 128, 8
    $region5: #{tpu_custom_call.1} parent=1 // pred_fallthru
      _
    // Predicated region
    $region6: #{tpu_custom_call.1} parent=1 // pred_check
      _
    $region7: #{tpu_custom_call.1} parent=1 // pred_check_branch
      %30 = sbr.rel (0) target = $region9
    $region8: #{tpu_custom_call.1} parent=1 // pred_region
      %32 = vsyncadd [#allocation6], 0
      %s33 = sshll.u32 %s1, 4
      %s34 = int_to_ptr.hbm [resolvable:$true] %s33
      %s35 = sshll.u32 [#allocation5], 4
      %s36 = int_to_ptr.vmem [resolvable:$true] %s35
      %41 = dma.hbm_to_vmem [thread:$0]  %s34, 128, %s36, [#allocation6], 64, 64, 4
    $region9: #{tpu_custom_call.1} parent=1 // pred_fallthru
      _
    // Predicated region
    $region10: #{tpu_custom_call.1} parent=1 // pred_check
      _
    $region11: #{tpu_custom_call.1} parent=1 // pred_check_branch
      %43 = sbr.rel (0) target = $region13
    $region12: #{tpu_custom_call.1} parent=1 // pred_region
      _
    $region13: #{tpu_custom_call.1} parent=1 // pred_fallthru
      _
    // Predicated region
    $region14: #{tpu_custom_call.1} parent=1 // pred_check
      _
    $region15: #{tpu_custom_call.1} parent=1 // pred_check_branch
      %45 = sbr.rel (0) target = $region17
    $region16: #{tpu_custom_call.1} parent=1 // pred_region
      %47 = vsyncadd [#allocation6], 0
      %s48 = sshll.u32 %s3, 4
      %s49 = int_to_ptr.hbm [resolvable:$true] %s48
      %s50 = sshll.u32 [#allocation7], 4
      %s51 = int_to_ptr.vmem [resolvable:$true] %s50
      %56 = dma.hbm_to_vmem [thread:$0]  %s49, 1024, %s51, [#allocation6], 64, 64, 4
    $region17: #{tpu_custom_call.1} parent=1 // pred_fallthru
      _
    // Predicated region
    $region18: #{tpu_custom_call.1} parent=1 // pred_check
      _
    $region19: #{tpu_custom_call.1} parent=1 // pred_check_branch
      %58 = sbr.rel (0) target = $region21
    $region20: #{tpu_custom_call.1} parent=1 // pred_region
      _
    $region21: #{tpu_custom_call.1} parent=1 // pred_fallthru
      _
    // Predicated region
    $region22: #{tpu_custom_call.1} parent=1 // pred_check
      _
    $region23: #{tpu_custom_call.1} parent=1 // pred_check_branch
      %60 = sbr.rel (0) target = $region25
    $region24: #{tpu_custom_call.1} parent=1 // pred_region
      %62 = vsyncadd [#allocation9], 0
      %s63 = sshll.u32 %s5, 4
      %s64 = int_to_ptr.hbm [resolvable:$true] %s63
      %s65 = sshll.u32 [#allocation8], 4
      %s66 = int_to_ptr.vmem [resolvable:$true] %s65
      %71 = dma.hbm_to_vmem [thread:$0]  %s64, 1024, %s66, [#allocation9], 64, 64, 4
    $region25: #{tpu_custom_call.1} parent=1 // pred_fallthru
      _
    // Predicated region
    $region26: #{tpu_custom_call.1} parent=1 // pred_check
      _
    $region27: #{tpu_custom_call.1} parent=1 // pred_check_branch
      %73 = sbr.rel (0) target = $region29
    $region28: #{tpu_custom_call.1} parent=1 // pred_region
      _
    $region29: #{tpu_custom_call.1} parent=1 // pred_fallthru
      _
    // Predicated region
    $region30: #{tpu_custom_call.1} parent=1 // pred_check
      _
    $region31: #{tpu_custom_call.1} parent=1 // pred_check_branch
      %75 = sbr.rel (0) target = $region33
    $region32: #{tpu_custom_call.1} parent=1 // pred_region
      %77 = dma.done [#allocation3], 256
    $region33: #{tpu_custom_call.1} parent=1 // pred_fallthru
      _
    // Predicated region
    $region34: #{tpu_custom_call.1} parent=1 // pred_check
      _
    $region35: #{tpu_custom_call.1} parent=1 // pred_check_branch
      %79 = sbr.rel (0) target = $region37
    $region36: #{tpu_custom_call.1} parent=1 // pred_region
      %81 = dma.done [#allocation6], 128
    $region37: #{tpu_custom_call.1} parent=1 // pred_fallthru
      _
    // Predicated region
    $region38: #{tpu_custom_call.1} parent=1 // pred_check
      _
    $region39: #{tpu_custom_call.1} parent=1 // pred_check_branch
      %83 = sbr.rel (0) target = $region41
    $region40: #{tpu_custom_call.1} parent=1 // pred_region
      %85 = dma.done [#allocation6], 1024
    $region41: #{tpu_custom_call.1} parent=1 // pred_fallthru
      _
    // Predicated region
    $region42: #{tpu_custom_call.1} parent=1 // pred_check
      _
    $region43: #{tpu_custom_call.1} parent=1 // pred_check_branch
      %87 = sbr.rel (0) target = $region45
    $region44: #{tpu_custom_call.1} parent=1 // pred_region
      %89 = dma.done [#allocation9], 1024
    $region45: #{tpu_custom_call.1} parent=1 // pred_fallthru
      _
    %v91 = vld [vmem:[#allocation2] sm:$0xff]
    %v92 = vld [vmem:[#allocation2 + $0x8] sm:$0xff]
    %v93 = vpack.c.bf16 %v92, %v91
    %v94 = vld [vmem:[#allocation5] sm:$0xf]
    %v95 = vld [vmem:[#allocation5 + $0x4] sm:$0xf]
    %v96 = vld [vmem:[%s2] sm:$0x1]
    %v98 = vperm.slane %v96, 0
    %v102 = vunpack.c.l.b16 %v94
    %v103 = vunpack.c.l.b16 %v95
    %v104 = vpack.c.b16 %v103, %v102
    %vm106 = vcmask 130048
    %v108 = vsel %vm106, %v93, 0
    %110 = vmatpush.bf16.msra.mxu0 0
    %111 = vmatpush.bf16.msra.mxu0 0
    %112 = vmatpush.bf16.msra.mxu0 0
    %113 = vmatpush.bf16.msra.mxu0 0
    %114 = vmatpush.bf16.msra.mxu0 0
    %115 = vmatpush.bf16.msra.mxu0 0
    %116 = vmatpush.bf16.msra.mxu0 0
    %117 = vmatpush.bf16.msra.mxu0 %v104
    %118 = vmatmul.bf16.gmra.mxu0 %v108
    %v119 = vpop.f32.mrf.mxu0
    %v120 = vadd.f32 %v98, %v119
    %v121 = vpop.f32.mrf.mxu0
    %v122 = vadd.f32 %v98, %v121
    %123 = vdwg.mxu0
    %v124 = vmax.f32 %v120, 0.0
    %v125 = vmax.f32 %v122, 0.0
    %v126 = vpack.c.bf16 %v125, %v124
    %v127 = vld [vmem:[#allocation7] sm:$0xf]
    %v128 = vld [vmem:[#allocation7 + $0x4] sm:$0xf]
    %v129 = vld [vmem:[#allocation7 + $0x8] sm:$0xf]
    %v130 = vld [vmem:[#allocation7 + $0xc] sm:$0xf]
    %v131 = vld [vmem:[#allocation7 + $0x10] sm:$0xf]
    %v132 = vld [vmem:[#allocation7 + $0x14] sm:$0xf]
    %v133 = vld [vmem:[#allocation7 + $0x18] sm:$0xf]
    %v134 = vld [vmem:[#allocation7 + $0x1c] sm:$0xf]
    %v135 = vld [vmem:[#allocation7 + $0x20] sm:$0xf]
    %v136 = vld [vmem:[#allocation7 + $0x24] sm:$0xf]
    %v137 = vld [vmem:[#allocation7 + $0x28] sm:$0xf]
    %v138 = vld [vmem:[#allocation7 + $0x2c] sm:$0xf]
    %v139 = vld [vmem:[#allocation7 + $0x30] sm:$0xf]
    %v140 = vld [vmem:[#allocation7 + $0x34] sm:$0xf]
    %v141 = vld [vmem:[#allocation7 + $0x38] sm:$0xf]
    %v142 = vld [vmem:[#allocation7 + $0x3c] sm:$0xf]
    %v143 = vld [vmem:[%s4] sm:$0x1]
    %v145 = vperm.slane %v143, 0
    %v163 = vunpack.c.l.b16 %v127
    %v164 = vunpack.c.l.b16 %v128
    %v165 = vunpack.c.l.b16 %v129
    %v166 = vunpack.c.l.b16 %v130
    %v167 = vunpack.c.l.b16 %v131
    %v168 = vunpack.c.l.b16 %v132
    %v169 = vunpack.c.l.b16 %v133
    %v170 = vunpack.c.l.b16 %v134
    %v171 = vunpack.c.l.b16 %v135
    %v172 = vunpack.c.l.b16 %v136
    %v173 = vunpack.c.l.b16 %v137
    %v174 = vunpack.c.l.b16 %v138
    %v175 = vunpack.c.l.b16 %v139
    %v176 = vunpack.c.l.b16 %v140
    %v177 = vunpack.c.l.b16 %v141
    %v178 = vunpack.c.l.b16 %v142
    %v179 = vpack.c.b16 %v164, %v163
    %v180 = vpack.c.b16 %v166, %v165
    %v181 = vpack.c.b16 %v168, %v167
    %v182 = vpack.c.b16 %v170, %v169
    %v183 = vpack.c.b16 %v172, %v171
    %v184 = vpack.c.b16 %v174, %v173
    %v185 = vpack.c.b16 %v176, %v175
    %v186 = vpack.c.b16 %v178, %v177
    %195 = vmatpush.bf16.msra.mxu0 %v186
    %196 = vmatpush.bf16.msra.mxu0 %v185
    %197 = vmatpush.bf16.msra.mxu0 %v184
    %198 = vmatpush.bf16.msra.mxu0 %v183
    %199 = vmatpush.bf16.msra.mxu0 %v182
    %200 = vmatpush.bf16.msra.mxu0 %v181
    %201 = vmatpush.bf16.msra.mxu0 %v180
    %202 = vmatpush.bf16.msra.mxu0 %v179
    %203 = vmatmul.bf16.gmra.mxu0 %v126
    %v204 = vpop.f32.mrf.mxu0
    %v205 = vadd.f32 %v145, %v204
    %v206 = vpop.f32.mrf.mxu0
    %v207 = vadd.f32 %v145, %v206
    %208 = vdwg.mxu0
    %v209 = vmax.f32 %v205, 0.0
    %v210 = vmax.f32 %v207, 0.0
    %v211 = vpack.c.bf16 %v210, %v209
    %v212 = vld [vmem:[#allocation8] sm:$0xf]
    %v213 = vld [vmem:[#allocation8 + $0x4] sm:$0xf]
    %v214 = vld [vmem:[#allocation8 + $0x8] sm:$0xf]
    %v215 = vld [vmem:[#allocation8 + $0xc] sm:$0xf]
    %v216 = vld [vmem:[#allocation8 + $0x10] sm:$0xf]
    %v217 = vld [vmem:[#allocation8 + $0x14] sm:$0xf]
    %v218 = vld [vmem:[#allocation8 + $0x18] sm:$0xf]
    %v219 = vld [vmem:[#allocation8 + $0x1c] sm:$0xf]
    %v220 = vld [vmem:[#allocation8 + $0x20] sm:$0xf]
    %v221 = vld [vmem:[#allocation8 + $0x24] sm:$0xf]
    %v222 = vld [vmem:[#allocation8 + $0x28] sm:$0xf]
    %v223 = vld [vmem:[#allocation8 + $0x2c] sm:$0xf]
    %v224 = vld [vmem:[#allocation8 + $0x30] sm:$0xf]
    %v225 = vld [vmem:[#allocation8 + $0x34] sm:$0xf]
    %v226 = vld [vmem:[#allocation8 + $0x38] sm:$0xf]
    %v227 = vld [vmem:[#allocation8 + $0x3c] sm:$0xf]
    %v228 = vld [vmem:[%s6] sm:$0x1]
    %v230 = vperm.slane %v228, 0
    %v248 = vunpack.c.l.b16 %v212
    %v249 = vunpack.c.l.b16 %v213
    %v250 = vunpack.c.l.b16 %v214
    %v251 = vunpack.c.l.b16 %v215
    %v252 = vunpack.c.l.b16 %v216
    %v253 = vunpack.c.l.b16 %v217
    %v254 = vunpack.c.l.b16 %v218
    %v255 = vunpack.c.l.b16 %v219
    %v256 = vunpack.c.l.b16 %v220
    %v257 = vunpack.c.l.b16 %v221
    %v258 = vunpack.c.l.b16 %v222
    %v259 = vunpack.c.l.b16 %v223
    %v260 = vunpack.c.l.b16 %v224
    %v261 = vunpack.c.l.b16 %v225
    %v262 = vunpack.c.l.b16 %v226
    %v263 = vunpack.c.l.b16 %v227
    %v264 = vpack.c.b16 %v249, %v248
    %v265 = vpack.c.b16 %v251, %v250
    %v266 = vpack.c.b16 %v253, %v252
    %v267 = vpack.c.b16 %v255, %v254
    %v268 = vpack.c.b16 %v257, %v256
    %v269 = vpack.c.b16 %v259, %v258
    %v270 = vpack.c.b16 %v261, %v260
    %v271 = vpack.c.b16 %v263, %v262
    %280 = vmatpush.bf16.msra.mxu0 %v271
    %281 = vmatpush.bf16.msra.mxu0 %v270
    %282 = vmatpush.bf16.msra.mxu0 %v269
    %283 = vmatpush.bf16.msra.mxu0 %v268
    %284 = vmatpush.bf16.msra.mxu0 %v267
    %285 = vmatpush.bf16.msra.mxu0 %v266
    %286 = vmatpush.bf16.msra.mxu0 %v265
    %287 = vmatpush.bf16.msra.mxu0 %v264
    %288 = vmatmul.bf16.gmra.mxu0 %v211
    %v289 = vpop.f32.mrf.mxu0
    %v290 = vadd.f32 %v230, %v289
    %v291 = vpop.f32.mrf.mxu0
    %v292 = vadd.f32 %v230, %v291
    %293 = vdwg.mxu0
    %v294 = vtanh.pop %v290
    %v295 = vtanh.pop %v292
    %v296 = vpack.c.bf16 %v294, %v294
    %v297 = vpack.c.bf16 %v295, %v295
    %298 = vst [vmem:[#allocation10] sm:$0xf] %v296
    %299 = vst [vmem:[#allocation10 + $0x4] sm:$0xf] %v297
    // Predicated region
    $region46: #{tpu_custom_call.1} parent=1 // pred_check
      _
    $region47: #{tpu_custom_call.1} parent=1 // pred_check_branch
      %301 = sbr.rel (0) target = $region49
    $region48: #{tpu_custom_call.1} parent=1 // pred_region
      %303 = vsyncadd [#allocation4], 0
      %s304 = sshll.u32 [#allocation10], 4
      %s305 = int_to_ptr.vmem [resolvable:$true] %s304
      %s306 = sshll.u32 %s7, 4
      %s307 = int_to_ptr.hbm [resolvable:$true] %s306
      %312 = dma.vmem_to_hbm [thread:$0]  %s305, 128, %s307, [#allocation4], 64, 64, 4
    $region49: #{tpu_custom_call.1} parent=1 // pred_fallthru
      _
    // Predicated region
    $region50: #{tpu_custom_call.1} parent=1 // pred_check
      _
    $region51: #{tpu_custom_call.1} parent=1 // pred_check_branch
      %314 = sbr.rel (0) target = $region53
    $region52: #{tpu_custom_call.1} parent=1 // pred_region
      %316 = dma.done [#allocation4], 128
    $region53: #{tpu_custom_call.1} parent=1 // pred_fallthru
      _
    %317 = vsyncpa [#allocation3], 1
    %318 = vsyncpa [#allocation6], 1
    %319 = vsyncpa [#allocation9], 1
    %320 = vsyncpa [#allocation4], 1

</llo_original>
